<compile_context>
chip_gen: v7x
topology: tpu7x:2x2x1
jax: 0.10.0
libtpu: 0.0.40
codegen_flags: <defaults>
</compile_context>

<pallas_src>
import jax
import jax.numpy as jnp
from jax.experimental import pallas as pl
from jax.experimental.pallas import tpu as pltpu


_LANE = 128              # TPU lane width (last-dim native tile)
_SUBLANE = 16            # sublane multiple safe for both f32 (8) and bf16 (16)
_STEP_OVERHEAD_ROWS = 64 # ~0.35 us fixed per grid step, expressed in rows of x DMA


def _round_up(x: int, m: int) -> int:
    return ((x + m - 1) // m) * m


def _round_down(x: int, m: int) -> int:
    return (x // m) * m


def _mlp_kernel(x_ref, w1_ref, b1_ref, w2_ref, b2_ref, o_ref):
    # x_ref : (TILE_N, D_IN_P)   f32   (batch tile, pipelined by BlockSpec)
    # w1_ref: (D_IN_P, HID_P)    bf16  (weight-stationary)
    # b1_ref: (1, HID_P)         f32
    # w2_ref: (HID_P, D_OUT_P)   bf16  (weight-stationary, lane-padded)
    # b2_ref: (1, D_OUT_P)       f32
    # o_ref : (TILE_N, D_OUT_P)  f32   (lane-dense store)
    #
    # f32 -> bf16 cast happens here on the VPU, so activations cross HBM once
    # at 4 B/elem with no wrapper-side cast pass.
    x = x_ref[...].astype(jnp.bfloat16)
    # Linear 1: bf16 operands on the MXU, f32 accumulation.
    h = jnp.dot(x, w1_ref[...], preferred_element_type=jnp.float32)
    # Bias + ReLU stay in f32 on the VPU (v5e has no bf16 VPU).
    h = jnp.maximum(h + b1_ref[...], 0.0)
    # Linear 2: deliberate bf16 downcast of activations for the MXU, f32 accum.
    y = jnp.dot(h.astype(jnp.bfloat16), w2_ref[...],
                preferred_element_type=jnp.float32)
    o_ref[...] = (y + b2_ref[...]).astype(o_ref.dtype)


def prepare_params(w1, b1, w2, b2):
    """Pad parameters to lane multiples and cast weights to bf16.

    Call ONCE (module init / outside the hot jit); the results are constants
    and must not be rebuilt per forward call.
    """
    d_in, hid = w1.shape
    hid2, d_out = w2.shape
    assert hid2 == hid
    d_in_p = _round_up(d_in, _LANE)
    hid_p = _round_up(hid, _LANE)
    d_out_p = _round_up(d_out, _LANE)   # lane-dense output store (e.g. 32 -> 128)

    def _pad2d(a, shape, dtype):
        a = a.astype(dtype)
        if a.shape == shape:
            return a                    # already aligned -> no copy op at all
        out = jnp.zeros(shape, dtype)
        return out.at[: a.shape[0], : a.shape[1]].set(a)

    # Zero padding is exact: padded input columns hit zero rows of W1; padded
    # hidden units are zero (zero weight col + zero bias) through ReLU and hit
    # zero rows of W2; padded output lanes are sliced off by the wrapper.
    w1p = _pad2d(w1, (d_in_p, hid_p), jnp.bfloat16)
    b1p = _pad2d(b1.reshape(1, -1), (1, hid_p), jnp.float32)
    w2p = _pad2d(w2, (hid_p, d_out_p), jnp.bfloat16)
    b2p = _pad2d(b2.reshape(1, -1), (1, d_out_p), jnp.float32)
    return (w1p, b1p, w2p, b2p), (d_in, hid, d_out)


def _choose_tile_n(n: int, max_tile_n: int) -> int:
    """Pick a batch tile that (a) is a sublane multiple, (b) balances zero-row
    padding against per-grid-step overhead, and (c) for large batches gives an
    even >= 2-step grid so both v7x TensorCores get work."""
    max_tile_n = max(_SUBLANE, _round_down(max_tile_n, _SUBLANE))
    cands = sorted(
        {c for c in (max_tile_n, 1024, 512, 256, 128, 64, 32, _SUBLANE)
         if _SUBLANE <= c <= max_tile_n},
        reverse=True)

    def cost(t):
        n_p = _round_up(n, t)
        return n_p + _STEP_OVERHEAD_ROWS * (n_p // t)

    tile_n = min(cands, key=lambda t: (cost(t), _round_up(n, t)))

    # v7x: once the batch is big enough that an extra ~0.35 us step is noise,
    # guarantee >= 2 grid steps split ~evenly across the two TensorCores.
    # No-op in effect on single-TC v5e/v6e.
    if n >= 4 * _SUBLANE and _round_up(n, tile_n) // tile_n < 2:
        half = _round_up(-(-n // 2), _SUBLANE)   # round_up(ceil(n/2), 16)
        tile_n = min(tile_n, half)
    return tile_n


def sequential_forward_prepared(x_nchw, prepared, dims, *, max_tile_n: int = 512):
    """Flatten -> Linear -> ReLU -> Linear with pre-padded/cast parameters."""
    w1p, b1p, w2p, b2p = prepared
    d_in, hid, d_out = dims
    n = x_nchw.shape[0]
    d_in_p, hid_p = w1p.shape
    d_out_p = w2p.shape[1]

    # ---- Flatten module (glue): NCHW -> (N, C*H*W), row-major like torch.nn.Flatten.
    x2d = x_nchw.reshape(n, -1).astype(jnp.float32)
    assert x2d.shape[1] == d_in

    tile_n = _choose_tile_n(n, max_tile_n)
    n_p = _round_up(n, tile_n)

    # Pad x only when needed (canonical d_in=1024 needs no column pad; an
    # aligned batch needs no row pad). The bf16 cast happens in-kernel.
    if (n_p, d_in_p) != x2d.shape:
        xp = jnp.zeros((n_p, d_in_p), jnp.float32).at[:n, :d_in].set(x2d)
    else:
        xp = x2d

    grid = (n_p // tile_n,)

    flops = 2 * n_p * (d_in_p * hid_p + hid_p * d_out_p)
    bytes_accessed = (xp.size * 4                     # f32 activations in
                      + w1p.size * 2 + w2p.size * 2   # bf16 weights
                      + b1p.size * 4 + b2p.size * 4   # f32 biases
                      + n_p * d_out_p * 4)            # f32 output

    out_padded = pl.pallas_call(
        _mlp_kernel,
        out_shape=jax.ShapeDtypeStruct((n_p, d_out_p), jnp.float32),
        grid=grid,
        in_specs=[
            # x: batch-tiled, double-buffered by the grid pipeline.
            pl.BlockSpec((tile_n, d_in_p), lambda i: (i, 0)),
            # Stationary operands (constant index_map): DMA'd once, VMEM-resident.
            pl.BlockSpec((d_in_p, hid_p), lambda i: (0, 0)),
            pl.BlockSpec((1, hid_p), lambda i: (0, 0)),
            pl.BlockSpec((hid_p, d_out_p), lambda i: (0, 0)),
            pl.BlockSpec((1, d_out_p), lambda i: (0, 0)),
        ],
        out_specs=pl.BlockSpec((tile_n, d_out_p), lambda i: (i, 0)),
        compiler_params=pltpu.CompilerParams(
            # Batch tiles are independent -> shard across both TCs on v7x.
            dimension_semantics=("parallel",),
            # Explicit limit: clears v5e's 16 MiB default scoped VMEM with large
            # f32 x tiles; within budget on v6e/v7x as well.
            vmem_limit_bytes=32 * 1024 * 1024,
        ),
        cost_estimate=pl.CostEstimate(
            flops=flops, bytes_accessed=bytes_accessed, transcendentals=0),
    )(xp, w1p, b1p, w2p, b2p)

    # Strip batch / lane padding. Output stays f32 (faithful to f32 Linear params).
    return out_padded[:n, :d_out]


def sequential_forward(x_nchw, w1, b1, w2, b2, *, max_tile_n: int = 512):
    """One-shot convenience wrapper. For a hot loop, call prepare_params() once
    and reuse sequential_forward_prepared()."""
    prepared, dims = prepare_params(w1, b1, w2, b2)
    return sequential_forward_prepared(x_nchw, prepared, dims, max_tile_n=max_tile_n)


def _reference_forward_f32(x_nchw, w1, b1, w2, b2):
    """Pure-JAX f32 reference with the original module semantics."""
    x = x_nchw.reshape(x_nchw.shape[0], -1)
    h = jnp.maximum(x @ w1 + b1, 0.0)
    return h @ w2 + b2


def _reference_forward_bf16(x_nchw, w1, b1, w2, b2):
    """Pure-JAX reference matching the kernel's bf16-operand / f32-accum numerics."""
    x = x_nchw.reshape(x_nchw.shape[0], -1).astype(jnp.bfloat16)
    h = jnp.dot(x, w1.astype(jnp.bfloat16),
                preferred_element_type=jnp.float32) + b1
    h = jnp.maximum(h, 0.0)
    y = jnp.dot(h.astype(jnp.bfloat16), w2.astype(jnp.bfloat16),
                preferred_element_type=jnp.float32) + b2
    return y


if __name__ == "__main__":
    key = jax.random.PRNGKey(0)
    k_x, k_w1, k_b1, k_w2, k_b2 = jax.random.split(key, 5)

    # Small shapes consistent with the chained modules.
    N, C, H, W = 2, 4, 16, 16          # input: (2, 4, 16, 16), NCHW
    D_IN = C * H * W                   # 1024
    HID = 128
    D_OUT = 32

    x = jax.random.normal(k_x, (N, C, H, W), dtype=jnp.float32)

    # Deterministic parameter init (uniform, kaiming-like bounds as in nn.Linear).
    bound1 = 1.0 / jnp.sqrt(D_IN)
    w1 = jax.random.uniform(k_w1, (D_IN, HID), jnp.float32, -bound1, bound1)
    b1 = jax.random.uniform(k_b1, (HID,), jnp.float32, -bound1, bound1)
    bound2 = 1.0 / jnp.sqrt(HID)
    w2 = jax.random.uniform(k_w2, (D_IN // 8 * 0 + HID, D_OUT), jnp.float32, -bound2, bound2)
    b2 = jax.random.uniform(k_b2, (D_OUT,), jnp.float32, -bound2, bound2)

    # Hoist parameter prep (pad + bf16 cast) out of the per-call path.
    prepared, dims = prepare_params(w1, b1, w2, b2)

    @jax.jit
    def fwd(xb, params):
        return sequential_forward_prepared(xb, params, dims)

    out = jax.block_until_ready(fwd(x, prepared))
    assert out.shape == (N, D_OUT)

    # Tight check vs a reference with identical bf16-operand / f32-accum math.
    ref_bf16 = _reference_forward_bf16(x, w1, b1, w2, b2)
    assert jnp.allclose(out, ref_bf16, atol=1e-3, rtol=1e-3), \
        "mismatch vs bf16-matched reference"

    # Loose check vs the full-f32 module semantics (bf16 operand rounding).
    ref_f32 = _reference_forward_f32(x, w1, b1, w2, b2)
    assert jnp.allclose(out, ref_f32, atol=5e-2, rtol=5e-2), \
        "mismatch vs f32 reference"

    print("KERNEL_OK")
</pallas_src>

<mosaic_0001>
module attributes {stable_mosaic.version = 11 : i64} {
  func.func @_mlp_kernel(%arg0: i32, %arg1: memref<16x1024xf32, #tpu.memory_space<vmem>>, %arg2: memref<1024x128xbf16, #tpu.memory_space<vmem>>, %arg3: memref<1x128xf32, #tpu.memory_space<vmem>>, %arg4: memref<128x128xbf16, #tpu.memory_space<vmem>>, %arg5: memref<1x128xf32, #tpu.memory_space<vmem>>, %arg6: memref<16x128xf32, #tpu.memory_space<vmem>>) attributes {dimension_semantics = [#tpu.dimension_semantics<parallel>], iteration_bounds = array<i64: 1>, scalar_prefetch = 0 : i64, scratch_operands = 0 : i64, tpu.core_type = #tpu.core_type<tc>, window_params = [{transform_indices = @transform_0, window_bounds = array<i64: 16, 1024>}, {pipeline_mode = #tpu.pipeline_mode<synchronous>, transform_indices = @transform_1, window_bounds = array<i64: 1024, 128>}, {pipeline_mode = #tpu.pipeline_mode<synchronous>, transform_indices = @transform_2, window_bounds = array<i64: 1, 128>}, {pipeline_mode = #tpu.pipeline_mode<synchronous>, transform_indices = @transform_3, window_bounds = array<i64: 128, 128>}, {pipeline_mode = #tpu.pipeline_mode<synchronous>, transform_indices = @transform_4, window_bounds = array<i64: 1, 128>}, {transform_indices = @transform_5, window_bounds = array<i64: 16, 128>}]} {
    %c0 = arith.constant 0 : index
    %c0_0 = arith.constant 0 : index
    %0 = vector.load %arg1[%c0, %c0_0] : memref<16x1024xf32, #tpu.memory_space<vmem>>, vector<16x1024xf32>
    %1 = arith.truncf %0 : vector<16x1024xf32> to vector<16x1024xbf16>
    %c0_1 = arith.constant 0 : index
    %c0_2 = arith.constant 0 : index
    %2 = vector.load %arg2[%c0_1, %c0_2] : memref<1024x128xbf16, #tpu.memory_space<vmem>>, vector<1024x128xbf16>
    %cst = arith.constant dense<0.000000e+00> : vector<16x128xf32>
    %3 = tpu.matmul %1, %2, %cst {dimension_numbers = #tpu.dot_dimension_numbers<[1], [0], [0], [1], [0, 0, 1, 1], [], []>} : vector<16x1024xbf16>, vector<1024x128xbf16>, vector<16x128xf32> -> vector<16x128xf32>
    %c0_3 = arith.constant 0 : index
    %c0_4 = arith.constant 0 : index
    %4 = vector.load %arg3[%c0_3, %c0_4] : memref<1x128xf32, #tpu.memory_space<vmem>>, vector<1x128xf32>
    %5 = vector.broadcast %4 : vector<1x128xf32> to vector<16x128xf32>
    %6 = arith.addf %3, %5 : vector<16x128xf32>
    %cst_5 = arith.constant 0.000000e+00 : f32
    %7 = vector.broadcast %cst_5 : f32 to vector<16x128xf32>
    %8 = arith.maximumf %6, %7 : vector<16x128xf32>
    %9 = arith.truncf %8 : vector<16x128xf32> to vector<16x128xbf16>
    %c0_6 = arith.constant 0 : index
    %c0_7 = arith.constant 0 : index
    %10 = vector.load %arg4[%c0_6, %c0_7] : memref<128x128xbf16, #tpu.memory_space<vmem>>, vector<128x128xbf16>
    %cst_8 = arith.constant dense<0.000000e+00> : vector<16x128xf32>
    %11 = tpu.matmul %9, %10, %cst_8 {dimension_numbers = #tpu.dot_dimension_numbers<[1], [0], [0], [1], [0, 0, 1, 1], [], []>} : vector<16x128xbf16>, vector<128x128xbf16>, vector<16x128xf32> -> vector<16x128xf32>
    %c0_9 = arith.constant 0 : index
    %c0_10 = arith.constant 0 : index
    %12 = vector.load %arg5[%c0_9, %c0_10] : memref<1x128xf32, #tpu.memory_space<vmem>>, vector<1x128xf32>
    %13 = vector.broadcast %12 : vector<1x128xf32> to vector<16x128xf32>
    %14 = arith.addf %11, %13 : vector<16x128xf32>
    %c0_11 = arith.constant 0 : index
    %c0_12 = arith.constant 0 : index
    %15 = vector.load %arg6[%c0_11, %c0_12] : memref<16x128xf32, #tpu.memory_space<vmem>>, vector<16x128xf32>
    tpu.vector_store %arg6[%c0_11, %c0_12], %14 {strides = array<i32>} : memref<16x128xf32, #tpu.memory_space<vmem>>, vector<16x128xf32>,
    return
  }
  func.func @transform_0(%arg0: i32) -> (i32, i32) {
    %c0_i32 = arith.constant 0 : i32
    %c0_i32_0 = arith.constant 0 : i32
    return %arg0, %c0_i32 : i32, i32
  }
  func.func @transform_1(%arg0: i32) -> (i32, i32) {
    %c0_i32 = arith.constant 0 : i32
    %c0_i32_0 = arith.constant 0 : i32
    %c0_i32_1 = arith.constant 0 : i32
    return %c0_i32, %c0_i32_0 : i32, i32
  }
  func.func @transform_2(%arg0: i32) -> (i32, i32) {
    %c0_i32 = arith.constant 0 : i32
    %c0_i32_0 = arith.constant 0 : i32
    %c0_i32_1 = arith.constant 0 : i32
    return %c0_i32, %c0_i32_0 : i32, i32
  }
  func.func @transform_3(%arg0: i32) -> (i32, i32) {
    %c0_i32 = arith.constant 0 : i32
    %c0_i32_0 = arith.constant 0 : i32
    %c0_i32_1 = arith.constant 0 : i32
    return %c0_i32, %c0_i32_0 : i32, i32
  }
  func.func @transform_4(%arg0: i32) -> (i32, i32) {
    %c0_i32 = arith.constant 0 : i32
    %c0_i32_0 = arith.constant 0 : i32
    %c0_i32_1 = arith.constant 0 : i32
    return %c0_i32, %c0_i32_0 : i32, i32
  }
  func.func @transform_5(%arg0: i32) -> (i32, i32) {
    %c0_i32 = arith.constant 0 : i32
    %c0_i32_0 = arith.constant 0 : i32
    return %arg0, %c0_i32 : i32, i32
  }
}

</mosaic_0001>

<llo_original>
// kernel: fwd.1
$region0: #{fwd.1}
  #allocation0 [shape = 'u32[]', space=smem, size = 0x4, offset = 0x4, fixed_abs, tag = 'smem constant byte address 0x4 - core index']
  #allocation1 [shape = 'u32[144,128]{1,0:T(1,128)}', space=vmem, size = 0x12000, scoped, tag = 'internal scratch']
  %s0 = inlined_call_operand.vmem [shape: f32[16,1024], index: 0, kind: input, shape index: {}]
  %s1 = inlined_call_operand.hbm [shape: bf16[1024,128], index: 1, kind: input, shape index: {}]
  %s2 = inlined_call_operand.vmem [shape: f32[1,128], index: 2, kind: input, shape index: {}]
  %s3 = inlined_call_operand.vmem [shape: bf16[128,128], index: 3, kind: input, shape index: {}]
  %s4 = inlined_call_operand.vmem [shape: f32[1,128], index: 4, kind: input, shape index: {}]
  %s5 = inlined_call_operand.vmem [shape: f32[16,128], index: 5, kind: output, shape index: {}]
  %s6 = sld [smem:[#allocation0]]
  $region34: #{fwd.1} parent=0
    _
  %s8 = ssub.s32 1, %s6
  %s9 = scalar_select 0, %s8, %s6
  $region1: #{fwd.1} parent=0
    #allocation2 [shape = 'u8[262144]{0}', space=vmem, size = 0x40000, scoped, tag = 'input window, operand 1, single buffered']
    #allocation3 [shape = 's32[1]{0}', space=sflag, size = 0x4, scoped, tag = 'scoped memory for fwd.1']
    %10 = vsyncpa [#allocation3], 0
    // Predicated region
    $region2: #{fwd.1} parent=1 // pred_check
      _
    $region3: #{fwd.1} parent=1 // pred_check_branch
      %12 = sbr.rel (0) target = $region5
    $region4: #{fwd.1} parent=1 // pred_region
      _
    $region5: #{fwd.1} parent=1 // pred_fallthru
      _
    // Predicated region
    $region6: #{fwd.1} parent=1 // pred_check
      _
    $region7: #{fwd.1} parent=1 // pred_check_branch
      %14 = sbr.rel (0) target = $region9
    $region8: #{fwd.1} parent=1 // pred_region
      %s16 = ssub.s32 8192, 8192
      %17 = vsyncadd [#allocation3], %s16
      %s18 = sshll.u32 [#allocation2], 4
      %s19 = int_to_ptr.vmem [resolvable:$true] %s18
      %24 = dma.hbm_to_vmem [thread:$0]  %s1, 8192, %s19, [#allocation3], 64, 64, 4
    $region9: #{fwd.1} parent=1 // pred_fallthru
      _
    // Predicated region
    $region10: #{fwd.1} parent=1 // pred_check
      _
    $region11: #{fwd.1} parent=1 // pred_check_branch
      %26 = sbr.rel (0) target = $region13
    $region12: #{fwd.1} parent=1 // pred_region
      _
    $region13: #{fwd.1} parent=1 // pred_fallthru
      _
    // Predicated region
    $region14: #{fwd.1} parent=1 // pred_check
      _
    $region15: #{fwd.1} parent=1 // pred_check_branch
      %28 = sbr.rel (0) target = $region17
    $region16: #{fwd.1} parent=1 // pred_region
      _
    $region17: #{fwd.1} parent=1 // pred_fallthru
      _
    // Predicated region
    $region18: #{fwd.1} parent=1 // pred_check
      _
    $region19: #{fwd.1} parent=1 // pred_check_branch
      %30 = sbr.rel (0) target = $region21
    $region20: #{fwd.1} parent=1 // pred_region
      _
    $region21: #{fwd.1} parent=1 // pred_fallthru
      _
    // Predicated region
    $region22: #{fwd.1} parent=1 // pred_check
      _
    $region23: #{fwd.1} parent=1 // pred_check_branch
      %32 = sbr.rel (0) target = $region25
    $region24: #{fwd.1} parent=1 // pred_region
      %33 = dma.done [#allocation3], 8192
    $region25: #{fwd.1} parent=1 // pred_fallthru
      _
    %v35 = vld [vmem:[%s0] sm:$0xff]
    %v36 = vld [vmem:[%s0 + $0x8] sm:$0xff]
    %v37 = vld [vmem:[%s0 + $0x10] sm:$0xff]
    %v38 = vld [vmem:[%s0 + $0x18] sm:$0xff]
    %v39 = vld [vmem:[%s0 + $0x20] sm:$0xff]
    %v40 = vld [vmem:[%s0 + $0x28] sm:$0xff]
    %v41 = vld [vmem:[%s0 + $0x30] sm:$0xff]
    %v42 = vld [vmem:[%s0 + $0x38] sm:$0xff]
    %v43 = vld [vmem:[%s0 + $0x40] sm:$0xff]
    %v44 = vld [vmem:[%s0 + $0x48] sm:$0xff]
    %v45 = vld [vmem:[%s0 + $0x50] sm:$0xff]
    %v46 = vld [vmem:[%s0 + $0x58] sm:$0xff]
    %v47 = vld [vmem:[%s0 + $0x60] sm:$0xff]
    %v48 = vld [vmem:[%s0 + $0x68] sm:$0xff]
    %v49 = vld [vmem:[%s0 + $0x70] sm:$0xff]
    %v50 = vld [vmem:[%s0 + $0x78] sm:$0xff]
    %v51 = vpack.c.bf16 %v43, %v35
    %v52 = vpack.c.bf16 %v44, %v36
    %v53 = vpack.c.bf16 %v45, %v37
    %v54 = vpack.c.bf16 %v46, %v38
    %v55 = vpack.c.bf16 %v47, %v39
    %v56 = vpack.c.bf16 %v48, %v40
    %v57 = vpack.c.bf16 %v49, %v41
    %v58 = vpack.c.bf16 %v50, %v42
    %v59 = vld [vmem:[#allocation2] sm:$0xf]
    %v60 = vld [vmem:[#allocation2 + $0x4] sm:$0xf]
    %v61 = vld [vmem:[#allocation2 + $0x8] sm:$0xf]
    %v62 = vld [vmem:[#allocation2 + $0xc] sm:$0xf]
    %v63 = vld [vmem:[#allocation2 + $0x10] sm:$0xf]
    %v64 = vld [vmem:[#allocation2 + $0x14] sm:$0xf]
    %v65 = vld [vmem:[#allocation2 + $0x18] sm:$0xf]
    %v66 = vld [vmem:[#allocation2 + $0x1c] sm:$0xf]
    %v67 = vld [vmem:[#allocation2 + $0x20] sm:$0xf]
    %v68 = vld [vmem:[#allocation2 + $0x24] sm:$0xf]
    %v69 = vld [vmem:[#allocation2 + $0x28] sm:$0xf]
    %v70 = vld [vmem:[#allocation2 + $0x2c] sm:$0xf]
    %v71 = vld [vmem:[#allocation2 + $0x30] sm:$0xf]
    %v72 = vld [vmem:[#allocation2 + $0x34] sm:$0xf]
    %v73 = vld [vmem:[#allocation2 + $0x38] sm:$0xf]
    %v74 = vld [vmem:[#allocation2 + $0x3c] sm:$0xf]
    %v75 = vld [vmem:[#allocation2 + $0x40] sm:$0xf]
    %v76 = vld [vmem:[#allocation2 + $0x44] sm:$0xf]
    %v77 = vld [vmem:[#allocation2 + $0x48] sm:$0xf]
    %v78 = vld [vmem:[#allocation2 + $0x4c] sm:$0xf]
    %v79 = vld [vmem:[#allocation2 + $0x50] sm:$0xf]
    %v80 = vld [vmem:[#allocation2 + $0x54] sm:$0xf]
    %v81 = vld [vmem:[#allocation2 + $0x58] sm:$0xf]
    %v82 = vld [vmem:[#allocation2 + $0x5c] sm:$0xf]
    %v83 = vld [vmem:[#allocation2 + $0x60] sm:$0xf]
    %v84 = vld [vmem:[#allocation2 + $0x64] sm:$0xf]
    %v85 = vld [vmem:[#allocation2 + $0x68] sm:$0xf]
    %v86 = vld [vmem:[#allocation2 + $0x6c] sm:$0xf]
    %v87 = vld [vmem:[#allocation2 + $0x70] sm:$0xf]
    %v88 = vld [vmem:[#allocation2 + $0x74] sm:$0xf]
    %v89 = vld [vmem:[#allocation2 + $0x78] sm:$0xf]
    %v90 = vld [vmem:[#allocation2 + $0x7c] sm:$0xf]
    %v91 = vld [vmem:[#allocation2 + $0x80] sm:$0xf]
    %v92 = vld [vmem:[#allocation2 + $0x84] sm:$0xf]
    %v93 = vld [vmem:[#allocation2 + $0x88] sm:$0xf]
    %v94 = vld [vmem:[#allocation2 + $0x8c] sm:$0xf]
    %v95 = vld [vmem:[#allocation2 + $0x90] sm:$0xf]
    %v96 = vld [vmem:[#allocation2 + $0x94] sm:$0xf]
    %v97 = vld [vmem:[#allocation2 + $0x98] sm:$0xf]
    %v98 = vld [vmem:[#allocation2 + $0x9c] sm:$0xf]
    %v99 = vld [vmem:[#allocation2 + $0xa0] sm:$0xf]
    %v100 = vld [vmem:[#allocation2 + $0xa4] sm:$0xf]
    %v101 = vld [vmem:[#allocation2 + $0xa8] sm:$0xf]
    %v102 = vld [vmem:[#allocation2 + $0xac] sm:$0xf]
    %v103 = vld [vmem:[#allocation2 + $0xb0] sm:$0xf]
    %v104 = vld [vmem:[#allocation2 + $0xb4] sm:$0xf]
    %v105 = vld [vmem:[#allocation2 + $0xb8] sm:$0xf]
    %v106 = vld [vmem:[#allocation2 + $0xbc] sm:$0xf]
    %v107 = vld [vmem:[#allocation2 + $0xc0] sm:$0xf]
    %v108 = vld [vmem:[#allocation2 + $0xc4] sm:$0xf]
    %v109 = vld [vmem:[#allocation2 + $0xc8] sm:$0xf]
    %v110 = vld [vmem:[#allocation2 + $0xcc] sm:$0xf]
    %v111 = vld [vmem:[#allocation2 + $0xd0] sm:$0xf]
    %v112 = vld [vmem:[#allocation2 + $0xd4] sm:$0xf]
    %v113 = vld [vmem:[#allocation2 + $0xd8] sm:$0xf]
    %v114 = vld [vmem:[#allocation2 + $0xdc] sm:$0xf]
    %v115 = vld [vmem:[#allocation2 + $0xe0] sm:$0xf]
    %v116 = vld [vmem:[#allocation2 + $0xe4] sm:$0xf]
    %v117 = vld [vmem:[#allocation2 + $0xe8] sm:$0xf]
    %v118 = vld [vmem:[#allocation2 + $0xec] sm:$0xf]
    %v119 = vld [vmem:[#allocation2 + $0xf0] sm:$0xf]
    %v120 = vld [vmem:[#allocation2 + $0xf4] sm:$0xf]
    %v121 = vld [vmem:[#allocation2 + $0xf8] sm:$0xf]
    %v122 = vld [vmem:[#allocation2 + $0xfc] sm:$0xf]
    %v123 = vld [vmem:[#allocation2 + $0x100] sm:$0xf]
    %v124 = vld [vmem:[#allocation2 + $0x104] sm:$0xf]
    %v125 = vld [vmem:[#allocation2 + $0x108] sm:$0xf]
    %v126 = vld [vmem:[#allocation2 + $0x10c] sm:$0xf]
    %v127 = vld [vmem:[#allocation2 + $0x110] sm:$0xf]
    %v128 = vld [vmem:[#allocation2 + $0x114] sm:$0xf]
    %v129 = vld [vmem:[#allocation2 + $0x118] sm:$0xf]
    %v130 = vld [vmem:[#allocation2 + $0x11c] sm:$0xf]
    %v131 = vld [vmem:[#allocation2 + $0x120] sm:$0xf]
    %v132 = vld [vmem:[#allocation2 + $0x124] sm:$0xf]
    %v133 = vld [vmem:[#allocation2 + $0x128] sm:$0xf]
    %v134 = vld [vmem:[#allocation2 + $0x12c] sm:$0xf]
    %v135 = vld [vmem:[#allocation2 + $0x130] sm:$0xf]
    %v136 = vld [vmem:[#allocation2 + $0x134] sm:$0xf]
    %v137 = vld [vmem:[#allocation2 + $0x138] sm:$0xf]
    %v138 = vld [vmem:[#allocation2 + $0x13c] sm:$0xf]
    %v139 = vld [vmem:[#allocation2 + $0x140] sm:$0xf]
    %v140 = vld [vmem:[#allocation2 + $0x144] sm:$0xf]
    %v141 = vld [vmem:[#allocation2 + $0x148] sm:$0xf]
    %v142 = vld [vmem:[#allocation2 + $0x14c] sm:$0xf]
    %v143 = vld [vmem:[#allocation2 + $0x150] sm:$0xf]
    %v144 = vld [vmem:[#allocation2 + $0x154] sm:$0xf]
    %v145 = vld [vmem:[#allocation2 + $0x158] sm:$0xf]
    %v146 = vld [vmem:[#allocation2 + $0x15c] sm:$0xf]
    %v147 = vld [vmem:[#allocation2 + $0x160] sm:$0xf]
    %v148 = vld [vmem:[#allocation2 + $0x164] sm:$0xf]
    %v149 = vld [vmem:[#allocation2 + $0x168] sm:$0xf]
    %v150 = vld [vmem:[#allocation2 + $0x16c] sm:$0xf]
    %v151 = vld [vmem:[#allocation2 + $0x170] sm:$0xf]
    %v152 = vld [vmem:[#allocation2 + $0x174] sm:$0xf]
    %v153 = vld [vmem:[#allocation2 + $0x178] sm:$0xf]
    %v154 = vld [vmem:[#allocation2 + $0x17c] sm:$0xf]
    %v155 = vld [vmem:[#allocation2 + $0x180] sm:$0xf]
    %v156 = vld [vmem:[#allocation2 + $0x184] sm:$0xf]
    %v157 = vld [vmem:[#allocation2 + $0x188] sm:$0xf]
    %v158 = vld [vmem:[#allocation2 + $0x18c] sm:$0xf]
    %v159 = vld [vmem:[#allocation2 + $0x190] sm:$0xf]
    %v160 = vld [vmem:[#allocation2 + $0x194] sm:$0xf]
    %v161 = vld [vmem:[#allocation2 + $0x198] sm:$0xf]
    %v162 = vld [vmem:[#allocation2 + $0x19c] sm:$0xf]
    %v163 = vld [vmem:[#allocation2 + $0x1a0] sm:$0xf]
    %v164 = vld [vmem:[#allocation2 + $0x1a4] sm:$0xf]
    %v165 = vld [vmem:[#allocation2 + $0x1a8] sm:$0xf]
    %v166 = vld [vmem:[#allocation2 + $0x1ac] sm:$0xf]
    %v167 = vld [vmem:[#allocation2 + $0x1b0] sm:$0xf]
    %v168 = vld [vmem:[#allocation2 + $0x1b4] sm:$0xf]
    %v169 = vld [vmem:[#allocation2 + $0x1b8] sm:$0xf]
    %v170 = vld [vmem:[#allocation2 + $0x1bc] sm:$0xf]
    %v171 = vld [vmem:[#allocation2 + $0x1c0] sm:$0xf]
    %v172 = vld [vmem:[#allocation2 + $0x1c4] sm:$0xf]
    %v173 = vld [vmem:[#allocation2 + $0x1c8] sm:$0xf]
    %v174 = vld [vmem:[#allocation2 + $0x1cc] sm:$0xf]
    %v175 = vld [vmem:[#allocation2 + $0x1d0] sm:$0xf]
    %v176 = vld [vmem:[#allocation2 + $0x1d4] sm:$0xf]
    %v177 = vld [vmem:[#allocation2 + $0x1d8] sm:$0xf]
    %v178 = vld [vmem:[#allocation2 + $0x1dc] sm:$0xf]
    %v179 = vld [vmem:[#allocation2 + $0x1e0] sm:$0xf]
    %v180 = vld [vmem:[#allocation2 + $0x1e4] sm:$0xf]
    %v181 = vld [vmem:[#allocation2 + $0x1e8] sm:$0xf]
    %v182 = vld [vmem:[#allocation2 + $0x1ec] sm:$0xf]
    %v183 = vld [vmem:[#allocation2 + $0x1f0] sm:$0xf]
    %v184 = vld [vmem:[#allocation2 + $0x1f4] sm:$0xf]
    %v185 = vld [vmem:[#allocation2 + $0x1f8] sm:$0xf]
    %v186 = vld [vmem:[#allocation2 + $0x1fc] sm:$0xf]
    %v187 = vld [vmem:[%s2] sm:$0x1]
    %v189 = vlaneseq
    %v190 = vshrl.u32 %v189, 7
    %v191 = vsub.s32 0, %v190
    %v192 = vrot.slane %v187, %v191
    %v322 = vunpack.c.l.b16 %v59
    %v323 = vunpack.c.l.b16 %v60
    %v324 = vunpack.c.l.b16 %v61
    %v325 = vunpack.c.l.b16 %v62
    %v326 = vunpack.c.l.b16 %v63
    %v327 = vunpack.c.l.b16 %v64
    %v328 = vunpack.c.l.b16 %v65
    %v329 = vunpack.c.l.b16 %v66
    %v330 = vunpack.c.l.b16 %v67
    %v331 = vunpack.c.l.b16 %v68
    %v332 = vunpack.c.l.b16 %v69
    %v333 = vunpack.c.l.b16 %v70
    %v334 = vunpack.c.l.b16 %v71
    %v335 = vunpack.c.l.b16 %v72
    %v336 = vunpack.c.l.b16 %v73
    %v337 = vunpack.c.l.b16 %v74
    %v338 = vunpack.c.l.b16 %v75
    %v339 = vunpack.c.l.b16 %v76
    %v340 = vunpack.c.l.b16 %v77
    %v341 = vunpack.c.l.b16 %v78
    %v342 = vunpack.c.l.b16 %v79
    %v343 = vunpack.c.l.b16 %v80
    %v344 = vunpack.c.l.b16 %v81
    %v345 = vunpack.c.l.b16 %v82
    %v346 = vunpack.c.l.b16 %v83
    %v347 = vunpack.c.l.b16 %v84
    %v348 = vunpack.c.l.b16 %v85
    %v349 = vunpack.c.l.b16 %v86
    %v350 = vunpack.c.l.b16 %v87
    %v351 = vunpack.c.l.b16 %v88
    %v352 = vunpack.c.l.b16 %v89
    %v353 = vunpack.c.l.b16 %v90
    %v354 = vunpack.c.l.b16 %v91
    %v355 = vunpack.c.l.b16 %v92
    %v356 = vunpack.c.l.b16 %v93
    %v357 = vunpack.c.l.b16 %v94
    %v358 = vunpack.c.l.b16 %v95
    %v359 = vunpack.c.l.b16 %v96
    %v360 = vunpack.c.l.b16 %v97
    %v361 = vunpack.c.l.b16 %v98
    %v362 = vunpack.c.l.b16 %v99
    %v363 = vunpack.c.l.b16 %v100
    %v364 = vunpack.c.l.b16 %v101
    %v365 = vunpack.c.l.b16 %v102
    %v366 = vunpack.c.l.b16 %v103
    %v367 = vunpack.c.l.b16 %v104
    %v368 = vunpack.c.l.b16 %v105
    %v369 = vunpack.c.l.b16 %v106
    %v370 = vunpack.c.l.b16 %v107
    %v371 = vunpack.c.l.b16 %v108
    %v372 = vunpack.c.l.b16 %v109
    %v373 = vunpack.c.l.b16 %v110
    %v374 = vunpack.c.l.b16 %v111
    %v375 = vunpack.c.l.b16 %v112
    %v376 = vunpack.c.l.b16 %v113
    %v377 = vunpack.c.l.b16 %v114
    %v378 = vunpack.c.l.b16 %v115
    %v379 = vunpack.c.l.b16 %v116
    %v380 = vunpack.c.l.b16 %v117
    %v381 = vunpack.c.l.b16 %v118
    %v382 = vunpack.c.l.b16 %v119
    %v383 = vunpack.c.l.b16 %v120
    %v384 = vunpack.c.l.b16 %v121
    %v385 = vunpack.c.l.b16 %v122
    %v386 = vunpack.c.l.b16 %v123
    %v387 = vunpack.c.l.b16 %v124
    %v388 = vunpack.c.l.b16 %v125
    %v389 = vunpack.c.l.b16 %v126
    %v390 = vunpack.c.l.b16 %v127
    %v391 = vunpack.c.l.b16 %v128
    %v392 = vunpack.c.l.b16 %v129
    %v393 = vunpack.c.l.b16 %v130
    %v394 = vunpack.c.l.b16 %v131
    %v395 = vunpack.c.l.b16 %v132
    %v396 = vunpack.c.l.b16 %v133
    %v397 = vunpack.c.l.b16 %v134
    %v398 = vunpack.c.l.b16 %v135
    %v399 = vunpack.c.l.b16 %v136
    %v400 = vunpack.c.l.b16 %v137
    %v401 = vunpack.c.l.b16 %v138
    %v402 = vunpack.c.l.b16 %v139
    %v403 = vunpack.c.l.b16 %v140
    %v404 = vunpack.c.l.b16 %v141
    %v405 = vunpack.c.l.b16 %v142
    %v406 = vunpack.c.l.b16 %v143
    %v407 = vunpack.c.l.b16 %v144
    %v408 = vunpack.c.l.b16 %v145
    %v409 = vunpack.c.l.b16 %v146
    %v410 = vunpack.c.l.b16 %v147
    %v411 = vunpack.c.l.b16 %v148
    %v412 = vunpack.c.l.b16 %v149
    %v413 = vunpack.c.l.b16 %v150
    %v414 = vunpack.c.l.b16 %v151
    %v415 = vunpack.c.l.b16 %v152
    %v416 = vunpack.c.l.b16 %v153
    %v417 = vunpack.c.l.b16 %v154
    %v418 = vunpack.c.l.b16 %v155
    %v419 = vunpack.c.l.b16 %v156
    %v420 = vunpack.c.l.b16 %v157
    %v421 = vunpack.c.l.b16 %v158
    %v422 = vunpack.c.l.b16 %v159
    %v423 = vunpack.c.l.b16 %v160
    %v424 = vunpack.c.l.b16 %v161
    %v425 = vunpack.c.l.b16 %v162
    %v426 = vunpack.c.l.b16 %v163
    %v427 = vunpack.c.l.b16 %v164
    %v428 = vunpack.c.l.b16 %v165
    %v429 = vunpack.c.l.b16 %v166
    %v430 = vunpack.c.l.b16 %v167
    %v431 = vunpack.c.l.b16 %v168
    %v432 = vunpack.c.l.b16 %v169
    %v433 = vunpack.c.l.b16 %v170
    %v434 = vunpack.c.l.b16 %v171
    %v435 = vunpack.c.l.b16 %v172
    %v436 = vunpack.c.l.b16 %v173
    %v437 = vunpack.c.l.b16 %v174
    %v438 = vunpack.c.l.b16 %v175
    %v439 = vunpack.c.l.b16 %v176
    %v440 = vunpack.c.l.b16 %v177
    %v441 = vunpack.c.l.b16 %v178
    %v442 = vunpack.c.l.b16 %v179
    %v443 = vunpack.c.l.b16 %v180
    %v444 = vunpack.c.l.b16 %v181
    %v445 = vunpack.c.l.b16 %v182
    %v446 = vunpack.c.l.b16 %v183
    %v447 = vunpack.c.l.b16 %v184
    %v448 = vunpack.c.l.b16 %v185
    %v449 = vunpack.c.l.b16 %v186
    %v450 = vpack.c.b16 %v323, %v322
    %v451 = vpack.c.b16 %v325, %v324
    %v452 = vpack.c.b16 %v327, %v326
    %v453 = vpack.c.b16 %v329, %v328
    %v454 = vpack.c.b16 %v331, %v330
    %v455 = vpack.c.b16 %v333, %v332
    %v456 = vpack.c.b16 %v335, %v334
    %v457 = vpack.c.b16 %v337, %v336
    %v458 = vpack.c.b16 %v339, %v338
    %v459 = vpack.c.b16 %v341, %v340
    %v460 = vpack.c.b16 %v343, %v342
    %v461 = vpack.c.b16 %v345, %v344
    %v462 = vpack.c.b16 %v347, %v346
    %v463 = vpack.c.b16 %v349, %v348
    %v464 = vpack.c.b16 %v351, %v350
    %v465 = vpack.c.b16 %v353, %v352
    %v466 = vpack.c.b16 %v355, %v354
    %v467 = vpack.c.b16 %v357, %v356
    %v468 = vpack.c.b16 %v359, %v358
    %v469 = vpack.c.b16 %v361, %v360
    %v470 = vpack.c.b16 %v363, %v362
    %v471 = vpack.c.b16 %v365, %v364
    %v472 = vpack.c.b16 %v367, %v366
    %v473 = vpack.c.b16 %v369, %v368
    %v474 = vpack.c.b16 %v371, %v370
    %v475 = vpack.c.b16 %v373, %v372
    %v476 = vpack.c.b16 %v375, %v374
    %v477 = vpack.c.b16 %v377, %v376
    %v478 = vpack.c.b16 %v379, %v378
    %v479 = vpack.c.b16 %v381, %v380
    %v480 = vpack.c.b16 %v383, %v382
    %v481 = vpack.c.b16 %v385, %v384
    %v482 = vpack.c.b16 %v387, %v386
    %v483 = vpack.c.b16 %v389, %v388
    %v484 = vpack.c.b16 %v391, %v390
    %v485 = vpack.c.b16 %v393, %v392
    %v486 = vpack.c.b16 %v395, %v394
    %v487 = vpack.c.b16 %v397, %v396
    %v488 = vpack.c.b16 %v399, %v398
    %v489 = vpack.c.b16 %v401, %v400
    %v490 = vpack.c.b16 %v403, %v402
    %v491 = vpack.c.b16 %v405, %v404
    %v492 = vpack.c.b16 %v407, %v406
    %v493 = vpack.c.b16 %v409, %v408
    %v494 = vpack.c.b16 %v411, %v410
    %v495 = vpack.c.b16 %v413, %v412
    %v496 = vpack.c.b16 %v415, %v414
    %v497 = vpack.c.b16 %v417, %v416
    %v498 = vpack.c.b16 %v419, %v418
    %v499 = vpack.c.b16 %v421, %v420
    %v500 = vpack.c.b16 %v423, %v422
    %v501 = vpack.c.b16 %v425, %v424
    %v502 = vpack.c.b16 %v427, %v426
    %v503 = vpack.c.b16 %v429, %v428
    %v504 = vpack.c.b16 %v431, %v430
    %v505 = vpack.c.b16 %v433, %v432
    %v506 = vpack.c.b16 %v435, %v434
    %v507 = vpack.c.b16 %v437, %v436
    %v508 = vpack.c.b16 %v439, %v438
    %v509 = vpack.c.b16 %v441, %v440
    %v510 = vpack.c.b16 %v443, %v442
    %v511 = vpack.c.b16 %v445, %v444
    %v512 = vpack.c.b16 %v447, %v446
    %v513 = vpack.c.b16 %v449, %v448
    %578 = vmatprep.subr.bf16.mxu0 0
    %579 = vmatpush1.bf16.msra.mxu0 %v450
    %580 = vmatprep.subr.bf16.mxu0 0
    %581 = vmatpush1.bf16.msra.mxu0 %v451
    %582 = vmatprep.subr.bf16.mxu0 0
    %583 = vmatpush1.bf16.msra.mxu0 %v452
    %584 = vmatprep.subr.bf16.mxu0 0
    %585 = vmatpush1.bf16.msra.mxu0 %v453
    %586 = vmatprep.subr.bf16.mxu0 0
    %587 = vmatpush1.bf16.msra.mxu0 %v454
    %588 = vmatprep.subr.bf16.mxu0 0
    %589 = vmatpush1.bf16.msra.mxu0 %v455
    %590 = vmatprep.subr.bf16.mxu0 0
    %591 = vmatpush1.bf16.msra.mxu0 %v456
    %592 = vmatprep.subr.bf16.mxu0 0
    %593 = vmatpush1.bf16.msra.mxu0 %v457
    %594 = vmatprep.subr.bf16.mxu0 0
    %595 = vmatpush1.bf16.msra.mxu0 %v458
    %596 = vmatprep.subr.bf16.mxu0 0
    %597 = vmatpush1.bf16.msra.mxu0 %v459
    %598 = vmatprep.subr.bf16.mxu0 0
    %599 = vmatpush1.bf16.msra.mxu0 %v460
    %600 = vmatprep.subr.bf16.mxu0 0
    %601 = vmatpush1.bf16.msra.mxu0 %v461
    %602 = vmatprep.subr.bf16.mxu0 0
    %603 = vmatpush1.bf16.msra.mxu0 %v462
    %604 = vmatprep.subr.bf16.mxu0 0
    %605 = vmatpush1.bf16.msra.mxu0 %v463
    %606 = vmatprep.subr.bf16.mxu0 0
    %607 = vmatpush1.bf16.msra.mxu0 %v464
    %608 = vmatprep.subr.bf16.mxu0 0
    %609 = vmatpush1.bf16.msra.mxu0 %v465
    %610 = vmatprep.mubr.bf16.mxu0 %v52
    %611 = vmatmul.mubr.bf16.gmra.mrb[0].mxu0 %v51
    %v612 = vpop.f32.mrb[0].mxu0
    %v613 = vadd.f32 %v192, %v612
    %v614 = vpop.f32.mrb[0].mxu0
    %v615 = vpop.f32.mrb[0].mxu0
    %v616 = vadd.f32 %v192, %v615
    %v617 = vpop.f32.mrb[0].mxu0
    %618 = vdwg.mxu0
    %619 = vmatprep.subr.bf16.mxu0 0
    %620 = vmatpush1.bf16.msra.mxu0 %v466
    %621 = vmatprep.subr.bf16.mxu0 0
    %622 = vmatpush1.bf16.msra.mxu0 %v467
    %623 = vmatprep.subr.bf16.mxu0 0
    %624 = vmatpush1.bf16.msra.mxu0 %v468
    %625 = vmatprep.subr.bf16.mxu0 0
    %626 = vmatpush1.bf16.msra.mxu0 %v469
    %627 = vmatprep.subr.bf16.mxu0 0
    %628 = vmatpush1.bf16.msra.mxu0 %v470
    %629 = vmatprep.subr.bf16.mxu0 0
    %630 = vmatpush1.bf16.msra.mxu0 %v471
    %631 = vmatprep.subr.bf16.mxu0 0
    %632 = vmatpush1.bf16.msra.mxu0 %v472
    %633 = vmatprep.subr.bf16.mxu0 0
    %634 = vmatpush1.bf16.msra.mxu0 %v473
    %635 = vmatprep.subr.bf16.mxu0 0
    %636 = vmatpush1.bf16.msra.mxu0 %v474
    %637 = vmatprep.subr.bf16.mxu0 0
    %638 = vmatpush1.bf16.msra.mxu0 %v475
    %639 = vmatprep.subr.bf16.mxu0 0
    %640 = vmatpush1.bf16.msra.mxu0 %v476
    %641 = vmatprep.subr.bf16.mxu0 0
    %642 = vmatpush1.bf16.msra.mxu0 %v477
    %643 = vmatprep.subr.bf16.mxu0 0
    %644 = vmatpush1.bf16.msra.mxu0 %v478
    %645 = vmatprep.subr.bf16.mxu0 0
    %646 = vmatpush1.bf16.msra.mxu0 %v479
    %647 = vmatprep.subr.bf16.mxu0 0
    %648 = vmatpush1.bf16.msra.mxu0 %v480
    %649 = vmatprep.subr.bf16.mxu0 0
    %650 = vmatpush1.bf16.msra.mxu0 %v481
    %651 = vmatprep.mubr.bf16.mxu0 %v54
    %652 = vmatmul.mubr.bf16.gmra.mrb[0].mxu0 %v53
    %v653 = vpop.f32.mrb[0].mxu0
    %v654 = vadd.f32 %v613, %v653
    %v655 = vpop.f32.mrb[0].mxu0
    %v656 = vpop.f32.mrb[0].mxu0
    %v657 = vadd.f32 %v616, %v656
    %v658 = vpop.f32.mrb[0].mxu0
    %659 = vdwg.mxu0
    %660 = vmatprep.subr.bf16.mxu0 0
    %661 = vmatpush1.bf16.msra.mxu0 %v482
    %662 = vmatprep.subr.bf16.mxu0 0
    %663 = vmatpush1.bf16.msra.mxu0 %v483
    %664 = vmatprep.subr.bf16.mxu0 0
    %665 = vmatpush1.bf16.msra.mxu0 %v484
    %666 = vmatprep.subr.bf16.mxu0 0
    %667 = vmatpush1.bf16.msra.mxu0 %v485
    %668 = vmatprep.subr.bf16.mxu0 0
    %669 = vmatpush1.bf16.msra.mxu0 %v486
    %670 = vmatprep.subr.bf16.mxu0 0
    %671 = vmatpush1.bf16.msra.mxu0 %v487
    %672 = vmatprep.subr.bf16.mxu0 0
    %673 = vmatpush1.bf16.msra.mxu0 %v488
    %674 = vmatprep.subr.bf16.mxu0 0
    %675 = vmatpush1.bf16.msra.mxu0 %v489
    %676 = vmatprep.subr.bf16.mxu0 0
    %677 = vmatpush1.bf16.msra.mxu0 %v490
    %678 = vmatprep.subr.bf16.mxu0 0
    %679 = vmatpush1.bf16.msra.mxu0 %v491
    %680 = vmatprep.subr.bf16.mxu0 0
    %681 = vmatpush1.bf16.msra.mxu0 %v492
    %682 = vmatprep.subr.bf16.mxu0 0
    %683 = vmatpush1.bf16.msra.mxu0 %v493
    %684 = vmatprep.subr.bf16.mxu0 0
    %685 = vmatpush1.bf16.msra.mxu0 %v494
    %686 = vmatprep.subr.bf16.mxu0 0
    %687 = vmatpush1.bf16.msra.mxu0 %v495
    %688 = vmatprep.subr.bf16.mxu0 0
    %689 = vmatpush1.bf16.msra.mxu0 %v496
    %690 = vmatprep.subr.bf16.mxu0 0
    %691 = vmatpush1.bf16.msra.mxu0 %v497
    %692 = vmatprep.mubr.bf16.mxu0 %v56
    %693 = vmatmul.mubr.bf16.gmra.mrb[0].mxu0 %v55
    %v694 = vpop.f32.mrb[0].mxu0
    %v695 = vadd.f32 %v654, %v694
    %v696 = vpop.f32.mrb[0].mxu0
    %v697 = vpop.f32.mrb[0].mxu0
    %v698 = vadd.f32 %v657, %v697
    %v699 = vpop.f32.mrb[0].mxu0
    %700 = vdwg.mxu0
    %701 = vmatprep.subr.bf16.mxu0 0
    %702 = vmatpush1.bf16.msra.mxu0 %v498
    %703 = vmatprep.subr.bf16.mxu0 0
    %704 = vmatpush1.bf16.msra.mxu0 %v499
    %705 = vmatprep.subr.bf16.mxu0 0
    %706 = vmatpush1.bf16.msra.mxu0 %v500
    %707 = vmatprep.subr.bf16.mxu0 0
    %708 = vmatpush1.bf16.msra.mxu0 %v501
    %709 = vmatprep.subr.bf16.mxu0 0
    %710 = vmatpush1.bf16.msra.mxu0 %v502
    %711 = vmatprep.subr.bf16.mxu0 0
    %712 = vmatpush1.bf16.msra.mxu0 %v503
    %713 = vmatprep.subr.bf16.mxu0 0
    %714 = vmatpush1.bf16.msra.mxu0 %v504
    %715 = vmatprep.subr.bf16.mxu0 0
    %716 = vmatpush1.bf16.msra.mxu0 %v505
    %717 = vmatprep.subr.bf16.mxu0 0
    %718 = vmatpush1.bf16.msra.mxu0 %v506
    %719 = vmatprep.subr.bf16.mxu0 0
    %720 = vmatpush1.bf16.msra.mxu0 %v507
    %721 = vmatprep.subr.bf16.mxu0 0
    %722 = vmatpush1.bf16.msra.mxu0 %v508
    %723 = vmatprep.subr.bf16.mxu0 0
    %724 = vmatpush1.bf16.msra.mxu0 %v509
    %725 = vmatprep.subr.bf16.mxu0 0
    %726 = vmatpush1.bf16.msra.mxu0 %v510
    %727 = vmatprep.subr.bf16.mxu0 0
    %728 = vmatpush1.bf16.msra.mxu0 %v511
    %729 = vmatprep.subr.bf16.mxu0 0
    %730 = vmatpush1.bf16.msra.mxu0 %v512
    %731 = vmatprep.subr.bf16.mxu0 0
    %732 = vmatpush1.bf16.msra.mxu0 %v513
    %733 = vmatprep.mubr.bf16.mxu0 %v58
    %734 = vmatmul.mubr.bf16.gmra.mrb[0].mxu0 %v57
    %v735 = vpop.f32.mrb[0].mxu0
    %v736 = vadd.f32 %v695, %v735
    %v737 = vpop.f32.mrb[0].mxu0
    %v738 = vpop.f32.mrb[0].mxu0
    %v739 = vadd.f32 %v698, %v738
    %v740 = vpop.f32.mrb[0].mxu0
    %741 = vdwg.mxu0
    %v742 = vmax.f32 %v736, 0.0
    %v743 = vmax.f32 %v739, 0.0
    %v744 = vpack.c.bf16 %v743, %v742
    %v745 = vld [vmem:[%s3] sm:$0xf]
    %v746 = vld [vmem:[%s3 + $0x4] sm:$0xf]
    %v747 = vld [vmem:[%s3 + $0x8] sm:$0xf]
    %v748 = vld [vmem:[%s3 + $0xc] sm:$0xf]
    %v749 = vld [vmem:[%s3 + $0x10] sm:$0xf]
    %v750 = vld [vmem:[%s3 + $0x14] sm:$0xf]
    %v751 = vld [vmem:[%s3 + $0x18] sm:$0xf]
    %v752 = vld [vmem:[%s3 + $0x1c] sm:$0xf]
    %v753 = vld [vmem:[%s3 + $0x20] sm:$0xf]
    %v754 = vld [vmem:[%s3 + $0x24] sm:$0xf]
    %v755 = vld [vmem:[%s3 + $0x28] sm:$0xf]
    %v756 = vld [vmem:[%s3 + $0x2c] sm:$0xf]
    %v757 = vld [vmem:[%s3 + $0x30] sm:$0xf]
    %v758 = vld [vmem:[%s3 + $0x34] sm:$0xf]
    %v759 = vld [vmem:[%s3 + $0x38] sm:$0xf]
    %v760 = vld [vmem:[%s3 + $0x3c] sm:$0xf]
    %v761 = vld [vmem:[%s4] sm:$0x1]
    %v763 = vlaneseq
    %v764 = vshrl.u32 %v763, 7
    %v765 = vsub.s32 0, %v764
    %v766 = vrot.slane %v761, %v765
    %v784 = vunpack.c.l.b16 %v745
    %v785 = vunpack.c.l.b16 %v746
    %v786 = vunpack.c.l.b16 %v747
    %v787 = vunpack.c.l.b16 %v748
    %v788 = vunpack.c.l.b16 %v749
    %v789 = vunpack.c.l.b16 %v750
    %v790 = vunpack.c.l.b16 %v751
    %v791 = vunpack.c.l.b16 %v752
    %v792 = vunpack.c.l.b16 %v753
    %v793 = vunpack.c.l.b16 %v754
    %v794 = vunpack.c.l.b16 %v755
    %v795 = vunpack.c.l.b16 %v756
    %v796 = vunpack.c.l.b16 %v757
    %v797 = vunpack.c.l.b16 %v758
    %v798 = vunpack.c.l.b16 %v759
    %v799 = vunpack.c.l.b16 %v760
    %v800 = vpack.c.b16 %v785, %v784
    %v801 = vpack.c.b16 %v787, %v786
    %v802 = vpack.c.b16 %v789, %v788
    %v803 = vpack.c.b16 %v791, %v790
    %v804 = vpack.c.b16 %v793, %v792
    %v805 = vpack.c.b16 %v795, %v794
    %v806 = vpack.c.b16 %v797, %v796
    %v807 = vpack.c.b16 %v799, %v798
    %816 = vmatprep.subr.bf16.mxu0 0
    %817 = vmatpush1.bf16.msra.mxu0 %v800
    %818 = vmatprep.subr.bf16.mxu0 0
    %819 = vmatpush1.bf16.msra.mxu0 %v801
    %820 = vmatprep.subr.bf16.mxu0 0
    %821 = vmatpush1.bf16.msra.mxu0 %v802
    %822 = vmatprep.subr.bf16.mxu0 0
    %823 = vmatpush1.bf16.msra.mxu0 %v803
    %824 = vmatprep.subr.bf16.mxu0 0
    %825 = vmatpush1.bf16.msra.mxu0 %v804
    %826 = vmatprep.subr.bf16.mxu0 0
    %827 = vmatpush1.bf16.msra.mxu0 %v805
    %828 = vmatprep.subr.bf16.mxu0 0
    %829 = vmatpush1.bf16.msra.mxu0 %v806
    %830 = vmatprep.subr.bf16.mxu0 0
    %831 = vmatpush1.bf16.msra.mxu0 %v807
    %832 = vmatprep.subr.bf16.mxu0 0
    %833 = vmatpush1.bf16.msra.mxu0 0
    %834 = vmatprep.subr.bf16.mxu0 0
    %835 = vmatpush1.bf16.msra.mxu0 0
    %836 = vmatprep.subr.bf16.mxu0 0
    %837 = vmatpush1.bf16.msra.mxu0 0
    %838 = vmatprep.subr.bf16.mxu0 0
    %839 = vmatpush1.bf16.msra.mxu0 0
    %840 = vmatprep.subr.bf16.mxu0 0
    %841 = vmatpush1.bf16.msra.mxu0 0
    %842 = vmatprep.subr.bf16.mxu0 0
    %843 = vmatpush1.bf16.msra.mxu0 0
    %844 = vmatprep.subr.bf16.mxu0 0
    %845 = vmatpush1.bf16.msra.mxu0 0
    %846 = vmatprep.subr.bf16.mxu0 0
    %847 = vmatpush1.bf16.msra.mxu0 0
    %848 = vmatprep.mubr.bf16.mxu0 0
    %849 = vmatmul.mubr.bf16.gmra.mrb[0].mxu0 %v744
    %v850 = vpop.f32.mrb[0].mxu0
    %v851 = vadd.f32 %v766, %v850
    %v852 = vpop.f32.mrb[0].mxu0
    %v853 = vpop.f32.mrb[0].mxu0
    %v854 = vadd.f32 %v766, %v853
    %v855 = vpop.f32.mrb[0].mxu0
    %856 = vdwg.mxu0
    %857 = vst [vmem:[%s5] sm:$0xff] %v851
    %858 = vst [vmem:[%s5 + $0x8] sm:$0xff] %v854
    // Predicated region
    $region26: #{fwd.1} parent=1 // pred_check
      _
    $region27: #{fwd.1} parent=1 // pred_check_branch
      %860 = sbr.rel (0) target = $region29
    $region28: #{fwd.1} parent=1 // pred_region
      _
    $region29: #{fwd.1} parent=1 // pred_fallthru
      _
    // Predicated region
    $region30: #{fwd.1} parent=1 // pred_check
      _
    $region31: #{fwd.1} parent=1 // pred_check_branch
      %862 = sbr.rel (0) target = $region33
    $region32: #{fwd.1} parent=1 // pred_region
      _
    $region33: #{fwd.1} parent=1 // pred_fallthru
      _
    %863 = vsyncpa [#allocation3], 1

</llo_original>
